<compile_context>
chip_gen: v5e
topology: v5e:2x2
jax: 0.10.0
libtpu: 0.0.40
codegen_flags: <defaults>
</compile_context>

<pallas_src>
import jax
import jax.numpy as jnp
from jax.experimental import pallas as pl
from jax.experimental.pallas import tpu as pltpu


def _square_kernel(x_ref, o_ref):
    x = x_ref[...]
    o_ref[...] = x * x


_TARGET_BLOCK_BYTES = 4 * 1024 * 1024  # ~4 MiB per block (16 MiB double-buffered in+out)


def square(x: jax.Array) -> jax.Array:
    """Elementwise x**2, matching torch.pow(x, 2) semantics (shape/dtype preserved)."""
    orig_shape = x.shape
    orig_dtype = x.dtype
    total = x.size
    if total == 0:
        return x

    dtype_size = jnp.dtype(orig_dtype).itemsize
    # Native sublane tile per dtype packing: f32 -> 8, bf16 -> 16, int8/fp8 -> 32.
    row_align = max(8, 32 // dtype_size)

    # Adaptive lane width: largest multiple-of-128 that divides the element
    # count exactly -> no pad, no final slice for typical NCHW activations.
    lane = next((c for c in (1024, 512, 256, 128) if total % c == 0), None)
    need_pad = lane is None
    if need_pad:
        lane = 128
        padded_total = ((total + lane - 1) // lane) * lane
        flat = jnp.pad(x.reshape(-1), (0, padded_total - total))
    else:
        padded_total = total
        flat = x.reshape(-1)

    rows = padded_total // lane
    x2d = flat.reshape(rows, lane)

    # ~4 MiB block rows, rounded down to the dtype's native sublane tile. If
    # the whole array is smaller, use a single full-array block (full-extent
    # dims are always legal block shapes; partial last blocks from the cdiv
    # grid are handled/masked by Pallas, and squaring garbage there is benign).
    tile_r = (_TARGET_BLOCK_BYTES // (lane * dtype_size)) // row_align * row_align
    tile_r = max(row_align, tile_r)
    tile_r = min(tile_r, rows)

    grid = (pl.cdiv(rows, tile_r),)

    compiler_params = pltpu.CompilerParams(
        dimension_semantics=("parallel",),
        vmem_limit_bytes=32 << 20,
        # Only meaningful on the pad path: let XLA fuse the pad/reshape
        # producer into the kernel's HBM read instead of materializing it.
        allow_input_fusion=[True] if need_pad else None,
    )

    # NOTE: input_output_aliases={0: 0} is intentionally omitted — the input to
    # pallas_call is a reshape of the caller's array, and forcing aliasing can
    # insert a defensive copy when the caller still uses x (net neutral/worse).
    out2d = pl.pallas_call(
        _square_kernel,
        out_shape=jax.ShapeDtypeStruct((rows, lane), orig_dtype),
        grid_spec=pltpu.PrefetchScalarGridSpec(
            num_scalar_prefetch=0,
            grid=grid,
            in_specs=[pl.BlockSpec((tile_r, lane), lambda i: (i, 0))],
            out_specs=pl.BlockSpec((tile_r, lane), lambda i: (i, 0)),
        ),
        compiler_params=compiler_params,
        cost_estimate=pl.CostEstimate(
            flops=total,
            transcendentals=0,
            bytes_accessed=2 * total * dtype_size,
        ),
    )(x2d)

    out_flat = out2d.reshape(-1)
    if need_pad:
        out_flat = out_flat[:total]
    return out_flat.reshape(orig_shape)


if __name__ == "__main__":
    key = jax.random.PRNGKey(0)

    # Small NCHW activation consistent with the module: (batch, channels, H, W).
    x = jax.random.normal(key, (2, 4, 16, 16), dtype=jnp.float32)
    y = square(x)
    jax.block_until_ready(y)
    assert y.shape == x.shape and y.dtype == x.dtype
    assert jnp.allclose(y, x * x, atol=0, rtol=0)

    # Element count not a multiple of 128 -> exercises the (fused) pad path.
    x2 = jax.random.normal(jax.random.PRNGKey(1), (3, 5, 7, 11), dtype=jnp.float32)
    y2 = square(x2)
    jax.block_until_ready(y2)
    assert y2.shape == x2.shape and y2.dtype == x2.dtype
    assert jnp.allclose(y2, x2 * x2, atol=0, rtol=0)

    # bf16 exercises the dtype-aware sublane alignment (row_align = 16).
    x3 = jax.random.normal(jax.random.PRNGKey(2), (2, 4, 16, 16), dtype=jnp.bfloat16)
    y3 = square(x3)
    jax.block_until_ready(y3)
    assert y3.shape == x3.shape and y3.dtype == x3.dtype
    assert jnp.allclose(y3.astype(jnp.float32), (x3 * x3).astype(jnp.float32),
                        atol=0, rtol=0)

    print("KERNEL_OK")
</pallas_src>

<mosaic_0001>
module attributes {stable_mosaic.version = 11 : i64} {
  func.func @_square_kernel(%arg0: i32, %arg1: memref<2x1024xf32, #tpu.memory_space<vmem>>, %arg2: memref<2x1024xf32, #tpu.memory_space<vmem>>) attributes {dimension_semantics = [#tpu.dimension_semantics<parallel>], iteration_bounds = array<i64: 1>, scalar_prefetch = 0 : i64, scratch_operands = 0 : i64, tpu.core_type = #tpu.core_type<tc>, window_params = [{transform_indices = @transform_0, window_bounds = array<i64: 2, 1024>}, {transform_indices = @transform_1, window_bounds = array<i64: 2, 1024>}]} {
    %c0 = arith.constant 0 : index
    %c0_0 = arith.constant 0 : index
    %0 = vector.load %arg1[%c0, %c0_0] : memref<2x1024xf32, #tpu.memory_space<vmem>>, vector<2x1024xf32>
    %1 = arith.mulf %0, %0 : vector<2x1024xf32>
    %c0_1 = arith.constant 0 : index
    %c0_2 = arith.constant 0 : index
    %2 = vector.load %arg2[%c0_1, %c0_2] : memref<2x1024xf32, #tpu.memory_space<vmem>>, vector<2x1024xf32>
    tpu.vector_store %arg2[%c0_1, %c0_2], %1 {strides = array<i32>} : memref<2x1024xf32, #tpu.memory_space<vmem>>, vector<2x1024xf32>,
    return
  }
  func.func @transform_0(%arg0: i32) -> (i32, i32) {
    %c0_i32 = arith.constant 0 : i32
    %c0_i32_0 = arith.constant 0 : i32
    return %arg0, %c0_i32 : i32, i32
  }
  func.func @transform_1(%arg0: i32) -> (i32, i32) {
    %c0_i32 = arith.constant 0 : i32
    %c0_i32_0 = arith.constant 0 : i32
    return %arg0, %c0_i32 : i32, i32
  }
}

</mosaic_0001>

<llo_original>
// kernel: tpu_custom_call.1
$region0: #{tpu_custom_call.1}
  #allocation0 [shape = 'u32[]', space=smem, size = 0x4, offset = 0x4, fixed_abs, tag = 'smem constant byte address 0x4 - core index']
  #allocation1 [shape = 'u32[72,128]{1,0:T(1,128)}', space=vmem, size = 0x9000, scoped, tag = 'internal scratch']
  %s0 = inlined_call_operand.hbm [shape: f32[2,1024], index: 0, kind: input, shape index: {}]
  %s1 = inlined_call_operand.hbm [shape: f32[2,1024], index: 1, kind: output, shape index: {}]
  %s2 = sld [smem:[#allocation0]]
  $region18: #{tpu_custom_call.1} parent=0
    _
  %s4 = ssub.s32 1, %s2
  %s5 = scalar_select 0, %s4, %s2
  $region1: #{tpu_custom_call.1} parent=0
    #allocation2 [shape = 'u8[8192]{0}', space=vmem, size = 0x2000, scoped, tag = 'input window, operand 0, single buffered']
    #allocation3 [shape = 's32[1]{0}', space=sflag, size = 0x4, scoped, tag = 'scoped memory for tpu_custom_call.1']
    #allocation4 [shape = 's32[1]{0}', space=sflag, size = 0x4, scoped, tag = 'scoped memory for tpu_custom_call.1']
    #allocation5 [shape = 'u8[8192]{0}', space=vmem, size = 0x2000, scoped, tag = 'output window, operand 0, single buffered']
    %6 = vsyncpa [#allocation3], 0
    %7 = vsyncpa [#allocation4], 0
    // Predicated region
    $region2: #{tpu_custom_call.1} parent=1 // pred_check
      _
    $region3: #{tpu_custom_call.1} parent=1 // pred_check_branch
      %9 = sbr.rel (0) target = $region5
    $region4: #{tpu_custom_call.1} parent=1 // pred_region
      %11 = vsyncadd [#allocation3], 0
      %s13 = sshll.u32 %s0, 4
      %s14 = int_to_ptr.hbm [resolvable:$true] %s13
      %s15 = sshll.u32 [#allocation2], 4
      %s16 = int_to_ptr.vmem [resolvable:$true] %s15
      %18 = dma.hbm_to_vmem [thread:$0]  %s14, 256, %s16, [#allocation3]
    $region5: #{tpu_custom_call.1} parent=1 // pred_fallthru
      _
    // Predicated region
    $region6: #{tpu_custom_call.1} parent=1 // pred_check
      _
    $region7: #{tpu_custom_call.1} parent=1 // pred_check_branch
      %20 = sbr.rel (0) target = $region9
    $region8: #{tpu_custom_call.1} parent=1 // pred_region
      %22 = dma.done [#allocation3], 256
    $region9: #{tpu_custom_call.1} parent=1 // pred_fallthru
      _
    %v23 = vld [vmem:[#allocation2] sm:$0xff]
    %v24 = vld [vmem:[#allocation2 + $0x8] sm:$0xff]
    %v25 = vmul.f32 %v23, %v23
    %v26 = vmul.f32 %v24, %v24
    %27 = vst [vmem:[#allocation5] sm:$0xff] %v25
    %28 = vst [vmem:[#allocation5 + $0x8] sm:$0xff] %v26
    // Predicated region
    $region10: #{tpu_custom_call.1} parent=1 // pred_check
      _
    $region11: #{tpu_custom_call.1} parent=1 // pred_check_branch
      %30 = sbr.rel (0) target = $region13
    $region12: #{tpu_custom_call.1} parent=1 // pred_region
      %32 = vsyncadd [#allocation4], 0
      %s34 = sshll.u32 [#allocation5], 4
      %s35 = int_to_ptr.vmem [resolvable:$true] %s34
      %s36 = sshll.u32 %s1, 4
      %s37 = int_to_ptr.hbm [resolvable:$true] %s36
      %39 = dma.vmem_to_hbm [thread:$0]  %s35, 256, %s37, [#allocation4]
    $region13: #{tpu_custom_call.1} parent=1 // pred_fallthru
      _
    // Predicated region
    $region14: #{tpu_custom_call.1} parent=1 // pred_check
      _
    $region15: #{tpu_custom_call.1} parent=1 // pred_check_branch
      %41 = sbr.rel (0) target = $region17
    $region16: #{tpu_custom_call.1} parent=1 // pred_region
      %43 = dma.done [#allocation4], 256
    $region17: #{tpu_custom_call.1} parent=1 // pred_fallthru
      _
    %44 = vsyncpa [#allocation3], 1
    %45 = vsyncpa [#allocation4], 1

</llo_original>
